<compile_context>
chip_gen: v5e
topology: v5e:2x2
jax: 0.10.0
libtpu: 0.0.40
codegen_flags: <defaults>
</compile_context>

<pallas_src>
import functools

import jax
import jax.numpy as jnp
from jax import lax
from jax.experimental import pallas as pl
from jax.experimental.pallas import tpu as pltpu

GAMMA = 1.5
ALPHA = 0.25
_ACC_ROWS = 8                      # sublane height of the (8, W) accumulator
_SENTINEL_PRED = -100.0            # with true = 0 -> exactly 0 loss in f32
_DEFAULT_BLOCK_ELEMS = 512 * 512   # ~1 MiB f32 per input per grid step


def _qfocal_kernel(pred_ref, true_ref, out_ref, *, rows, inner_steps,
                   block_rows, sub, lane_width, gamma, alpha, needs_mask):
    c = pl.program_id(0)          # TensorCore split (CORE_PARALLEL when > 1)
    k = pl.program_id(1)          # streaming / reduction axis ("arbitrary")
    W = lane_width
    n_sub = block_rows // sub
    block_row0 = (c * inner_steps + k) * block_rows

    @pl.when(k == 0)
    def _():
        out_ref[...] = jnp.zeros_like(out_ref)

    def slab_loss(x, y):
        x = x.astype(jnp.float32)
        y = y.astype(jnp.float32)
        # One shared exponential feeds both the stable BCE and the sigmoid.
        e = jnp.exp(-jnp.abs(x))                              # EUP: exp
        bce = jnp.maximum(x, 0.0) - x * y + jnp.log1p(e)      # EUP: log1p
        inv = pl.reciprocal(1.0 + e, approx=True)             # EUP: vrcp (cheap)
        p = jnp.where(x >= 0.0, inv, e * inv)                 # sigmoid(x), no 2nd exp
        af = y * alpha + (1.0 - y) * (1.0 - alpha)
        t = jnp.abs(y - p)
        if gamma == 1.5:
            # t**1.5 as t*t*rsqrt(t): one EUP push (vs a possible rsqrt+recip
            # pair for sqrt); the select guards the 0*inf case at t == 0.
            mod = jnp.where(t > 0.0, (t * t) * lax.rsqrt(t), 0.0)
        elif gamma == 2.0:
            mod = t * t
        elif gamma == 1.0:
            mod = t
        else:
            mod = jnp.where(t > 0.0, t ** gamma, 0.0)
        return bce * af * mod

    def fold(a):                  # (sub, W) -> (8, W); pure VPU sublane-slab adds
        return a.reshape(sub // _ACC_ROWS, _ACC_ROWS, W).sum(axis=0)

    def accumulate(masked):
        def body(s, acc):
            i = pl.multiple_of(s * sub, sub)
            loss = slab_loss(pred_ref[pl.ds(i, sub), :],
                             true_ref[pl.ds(i, sub), :])
            if masked:  # only emitted/executed for blocks crossing `rows`
                r = (block_row0 + i) + lax.broadcasted_iota(jnp.int32, (sub, W), 0)
                loss = jnp.where(r < rows, loss, 0.0)
            return acc + fold(loss)

        acc = lax.fori_loop(0, n_sub, body,
                            jnp.zeros((_ACC_ROWS, W), jnp.float32), unroll=True)
        out_ref[...] += acc

    if needs_mask:
        ragged = block_row0 + block_rows > rows

        @pl.when(jnp.logical_not(ragged))
        def _():
            accumulate(masked=False)     # hot path: no per-element mask work

        @pl.when(ragged)
        def _():
            accumulate(masked=True)      # only the block(s) past the real rows
    else:
        accumulate(masked=False)


def _pad_sentinel(pred_f, true_f, n):
    pred_f = jnp.concatenate([pred_f, jnp.full((n,), _SENTINEL_PRED, pred_f.dtype)])
    true_f = jnp.concatenate([true_f, jnp.zeros((n,), true_f.dtype)])
    return pred_f, true_f


def qfocal_loss(pred, true, *, gamma=GAMMA, alpha=ALPHA, reduction="mean",
                block_elems=_DEFAULT_BLOCK_ELEMS, num_cores=1):
    """QFocalLoss forward (BCEWithLogitsLoss base). Returns an f32 scalar.

    num_cores: set to 2 on TPU v7x to shard the reduction across both
    TensorCores (lowered with pltpu.CORE_PARALLEL). Keep the default 1 on
    single-TensorCore chips (v5e/v6e), where a core split is just a serial
    loop that adds padding and grid overhead.
    """
    assert pred.shape == true.shape
    total = pred.size
    assert total > 0

    pred_f = pred.reshape(-1)        # contiguous reshape: no copy
    true_f = true.reshape(-1)
    total_p = total

    # Lane-dense 2-D view. Zero-copy whenever total is a multiple of 128:
    # choose the widest lane width (<=512) that divides. Only truly ragged
    # element counts fall back to a tiny sentinel pad (loss of the sentinel is
    # exactly 0, so no in-kernel masking of padded elements is ever needed).
    if total_p % 128 != 0:
        n = 128 - total_p % 128
        pred_f, true_f = _pad_sentinel(pred_f, true_f, n)   # rare fallback (copies)
        total_p += n
    W = 512 if total_p % 512 == 0 else (256 if total_p % 256 == 0 else 128)
    rows = total_p // W
    if rows < _ACC_ROWS:             # tiny tensors: pad up to one (8, W) tile
        n = (_ACC_ROWS - rows) * W
        pred_f, true_f = _pad_sentinel(pred_f, true_f, n)
        total_p += n
        rows = _ACC_ROWS
    pred2d = pred_f.reshape(rows, W)
    true2d = true_f.reshape(rows, W)

    # Block geometry: inner slabs of `sub` rows (multiples of 16 on the main
    # path, bf16-friendly); block_rows <= rows so blocks are at most partially
    # out of bounds; ~block_elems elements (~1 MiB f32) per input per grid step.
    sub = 128 if rows >= 128 else (rows // _ACC_ROWS) * _ACC_ROWS
    br_target = max(sub, (block_elems // W) // sub * sub)
    br = min(br_target, max(sub, (rows // sub) * sub))
    inner_steps = pl.cdiv(pl.cdiv(rows, num_cores), br)
    coverage = num_cores * inner_steps * br
    needs_mask = coverage != rows

    kernel = functools.partial(
        _qfocal_kernel, rows=rows, inner_steps=inner_steps, block_rows=br,
        sub=sub, lane_width=W, gamma=gamma, alpha=alpha, needs_mask=needs_mask)

    lead_sem = pltpu.CORE_PARALLEL if num_cores > 1 else "arbitrary"
    partials = pl.pallas_call(
        kernel,
        out_shape=jax.ShapeDtypeStruct((num_cores * _ACC_ROWS, W), jnp.float32),
        grid_spec=pltpu.PrefetchScalarGridSpec(
            num_scalar_prefetch=0,
            grid=(num_cores, inner_steps),
            in_specs=[
                pl.BlockSpec((br, W), lambda c, k: (c * inner_steps + k, 0)),
                pl.BlockSpec((br, W), lambda c, k: (c * inner_steps + k, 0)),
            ],
            # Block index constant across k -> VMEM-resident accumulator;
            # written back to HBM once per core slice.
            out_specs=pl.BlockSpec((_ACC_ROWS, W), lambda c, k: (c, 0)),
        ),
        compiler_params=pltpu.CompilerParams(
            dimension_semantics=(lead_sem, "arbitrary"),
            vmem_limit_bytes=32 * 1024 * 1024,   # required on v5e (16 MiB default)
        ),
    )(pred2d, true2d)

    total_loss = partials.sum()
    if reduction == "mean":
        return total_loss / jnp.float32(total)
    elif reduction == "sum":
        return total_loss
    else:
        # TODO(synk): reduction='none' (full elementwise output) not implemented.
        raise NotImplementedError("reduction='none' is not supported by this kernel")


def qfocal_loss_ref(pred, true, gamma=GAMMA, alpha=ALPHA):
    x = pred.astype(jnp.float32)
    y = true.astype(jnp.float32)
    bce = jnp.maximum(x, 0.0) - x * y + jnp.log1p(jnp.exp(-jnp.abs(x)))
    p = jax.nn.sigmoid(x)
    loss = bce * (y * alpha + (1 - y) * (1 - alpha)) * jnp.abs(y - p) ** gamma
    return loss.mean()


if __name__ == "__main__":
    key = jax.random.PRNGKey(0)
    k1, k2, k3, k4, k5, k6 = jax.random.split(key, 6)

    # Small NCHW: batch=2, channels=4, spatial=16x16 (2048 elements).
    pred = jax.random.normal(k1, (2, 4, 16, 16), dtype=jnp.float32)
    true = (jax.random.uniform(k2, (2, 4, 16, 16)) > 0.5).astype(jnp.float32)
    out = jax.block_until_ready(qfocal_loss(pred, true))
    ref = qfocal_loss_ref(pred, true)
    assert jnp.allclose(out, ref, rtol=2e-3, atol=1e-6), (out, ref)

    # YOLO-ish shape: zero-copy wrapper path + ragged last row-block (mask path).
    pred2 = jax.random.normal(k3, (4, 3, 80, 80), dtype=jnp.float32)
    true2 = (jax.random.uniform(k4, (4, 3, 80, 80)) > 0.5).astype(jnp.float32)
    out2 = jax.block_until_ready(qfocal_loss(pred2, true2))
    ref2 = qfocal_loss_ref(pred2, true2)
    assert jnp.allclose(out2, ref2, rtol=2e-3, atol=1e-6), (out2, ref2)

    # Larger shape: multi-step accumulation + inner sub-block loop (n_sub > 1).
    pred3 = jax.random.normal(k5, (8, 3, 160, 160), dtype=jnp.float32)
    true3 = (jax.random.uniform(k6, (8, 3, 160, 160)) > 0.5).astype(jnp.float32)
    out3 = jax.block_until_ready(qfocal_loss(pred3, true3))
    ref3 = qfocal_loss_ref(pred3, true3)
    assert jnp.allclose(out3, ref3, rtol=2e-3, atol=1e-6), (out3, ref3)

    # Ragged element count (not a multiple of 128): sentinel-pad fallback path.
    pred4 = jax.random.normal(k1, (1, 3, 13, 13), dtype=jnp.float32)
    true4 = (jax.random.uniform(k2, (1, 3, 13, 13)) > 0.5).astype(jnp.float32)
    out4 = jax.block_until_ready(qfocal_loss(pred4, true4))
    ref4 = qfocal_loss_ref(pred4, true4)
    assert jnp.allclose(out4, ref4, rtol=2e-3, atol=1e-6), (out4, ref4)

    # bf16 inputs (halved HBM bytes-in; upcast to f32 inside the kernel).
    out5 = jax.block_until_ready(
        qfocal_loss(pred2.astype(jnp.bfloat16), true2.astype(jnp.bfloat16)))
    ref5 = qfocal_loss_ref(pred2.astype(jnp.bfloat16), true2.astype(jnp.bfloat16))
    assert jnp.allclose(out5, ref5, rtol=2e-3, atol=1e-6), (out5, ref5)

    print("KERNEL_OK")
</pallas_src>

<mosaic_0001>
module attributes {stable_mosaic.version = 11 : i64} {
  func.func @_qfocal_kernel(%arg0: i32, %arg1: i32, %arg2: memref<8x512xf32, #tpu.memory_space<vmem>>, %arg3: memref<8x512xf32, #tpu.memory_space<vmem>>, %arg4: memref<8x512xf32, #tpu.memory_space<vmem>>) attributes {dimension_semantics = [#tpu.dimension_semantics<arbitrary>, #tpu.dimension_semantics<arbitrary>], iteration_bounds = array<i64: 1, 1>, scalar_prefetch = 0 : i64, scratch_operands = 0 : i64, tpu.core_type = #tpu.core_type<tc>, window_params = [{transform_indices = @transform_0, window_bounds = array<i64: 8, 512>}, {transform_indices = @transform_1, window_bounds = array<i64: 8, 512>}, {transform_indices = @transform_2, window_bounds = array<i64: 8, 512>}]} {
    %c0_i32 = arith.constant 0 : i32
    %0 = arith.cmpi eq, %arg1, %c0_i32 : i32
    %1 = arith.extui %0 : i1 to i32
    %c0_i32_0 = arith.constant 0 : i32
    %2 = arith.cmpi ne, %1, %c0_i32_0 : i32
    scf.if %2 {
      %cst_17 = arith.constant 0.000000e+00 : f32
      %51 = vector.broadcast %cst_17 : f32 to vector<8x512xf32>
      %c0_18 = arith.constant 0 : index
      %c0_19 = arith.constant 0 : index
      %52 = vector.load %arg4[%c0_18, %c0_19] : memref<8x512xf32, #tpu.memory_space<vmem>>, vector<8x512xf32>
      tpu.vector_store %arg4[%c0_18, %c0_19], %51 {strides = array<i32>} : memref<8x512xf32, #tpu.memory_space<vmem>>, vector<8x512xf32>,
    } else {
    }
    %cst = arith.constant 0.000000e+00 : f32
    %3 = vector.broadcast %cst : f32 to vector<8x512xf32>
    %c0_i32_1 = arith.constant 0 : i32
    %c8_i32 = arith.constant 8 : i32
    %4 = arith.muli %c0_i32_1, %c8_i32 : i32
    %5 = tpu.assume_multiple %4, 8 : i32
    %6 = arith.index_cast %5 : i32 to index
    %c0 = arith.constant 0 : index
    %7 = vector.load %arg2[%6, %c0] : memref<8x512xf32, #tpu.memory_space<vmem>>, vector<8x512xf32>
    %8 = arith.index_cast %5 : i32 to index
    %c0_2 = arith.constant 0 : index
    %9 = vector.load %arg3[%8, %c0_2] : memref<8x512xf32, #tpu.memory_space<vmem>>, vector<8x512xf32>
    %10 = math.absf %7 : vector<8x512xf32>
    %cst_3 = arith.constant 0.000000e+00 : f32
    %11 = vector.broadcast %cst_3 : f32 to vector<8x512xf32>
    %12 = arith.subf %11, %10 : vector<8x512xf32>
    %13 = math.exp %12 : vector<8x512xf32>
    %cst_4 = arith.constant 0.000000e+00 : f32
    %14 = vector.broadcast %cst_4 : f32 to vector<8x512xf32>
    %15 = arith.maximumf %7, %14 : vector<8x512xf32>
    %16 = arith.mulf %7, %9 : vector<8x512xf32>
    %17 = arith.subf %15, %16 : vector<8x512xf32>
    %18 = math.log1p %13 : vector<8x512xf32>
    %19 = arith.addf %17, %18 : vector<8x512xf32>
    %cst_5 = arith.constant 1.000000e+00 : f32
    %20 = vector.broadcast %cst_5 : f32 to vector<8x512xf32>
    %21 = arith.addf %20, %13 : vector<8x512xf32>
    %22 = tpu.reciprocal %21 {approx = true} : vector<8x512xf32> -> vector<8x512xf32>
    %cst_6 = arith.constant 0.000000e+00 : f32
    %23 = vector.broadcast %cst_6 : f32 to vector<8x512xf32>
    %24 = arith.cmpf oge, %7, %23 : vector<8x512xf32>
    %25 = arith.mulf %13, %22 : vector<8x512xf32>
    %26 = arith.select %24, %22, %25 : vector<8x512xi1>, vector<8x512xf32>
    %cst_7 = arith.constant 2.500000e-01 : f32
    %27 = vector.broadcast %cst_7 : f32 to vector<8x512xf32>
    %28 = arith.mulf %9, %27 : vector<8x512xf32>
    %cst_8 = arith.constant 1.000000e+00 : f32
    %29 = vector.broadcast %cst_8 : f32 to vector<8x512xf32>
    %30 = arith.subf %29, %9 : vector<8x512xf32>
    %cst_9 = arith.constant 7.500000e-01 : f32
    %31 = vector.broadcast %cst_9 : f32 to vector<8x512xf32>
    %32 = arith.mulf %30, %31 : vector<8x512xf32>
    %33 = arith.addf %28, %32 : vector<8x512xf32>
    %34 = arith.subf %9, %26 : vector<8x512xf32>
    %35 = math.absf %34 : vector<8x512xf32>
    %cst_10 = arith.constant 0.000000e+00 : f32
    %36 = vector.broadcast %cst_10 : f32 to vector<8x512xf32>
    %37 = arith.cmpf ogt, %35, %36 : vector<8x512xf32>
    %38 = arith.mulf %35, %35 : vector<8x512xf32>
    %39 = math.rsqrt %35 : vector<8x512xf32>
    %40 = arith.mulf %38, %39 : vector<8x512xf32>
    %cst_11 = arith.constant 0.000000e+00 : f32
    %41 = vector.broadcast %cst_11 : f32 to vector<8x512xf32>
    %42 = arith.select %37, %40, %41 : vector<8x512xi1>, vector<8x512xf32>
    %43 = arith.mulf %19, %33 : vector<8x512xf32>
    %44 = arith.mulf %43, %42 : vector<8x512xf32>
    %45 = vector.shape_cast %44 : vector<8x512xf32> to vector<1x8x512xf32>
    %cst_12 = arith.constant dense<0.000000e+00> : vector<8x512xf32>
    %46 = vector.multi_reduction <add>, %45, %cst_12 [0] : vector<1x8x512xf32> to vector<8x512xf32>
    %47 = arith.addf %3, %46 : vector<8x512xf32>
    %c1_i32 = arith.constant 1 : i32
    %c0_13 = arith.constant 0 : index
    %c0_14 = arith.constant 0 : index
    %48 = vector.load %arg4[%c0_13, %c0_14] : memref<8x512xf32, #tpu.memory_space<vmem>>, vector<8x512xf32>
    %49 = arith.addf %48, %47 : vector<8x512xf32>
    %c0_15 = arith.constant 0 : index
    %c0_16 = arith.constant 0 : index
    %50 = vector.load %arg4[%c0_15, %c0_16] : memref<8x512xf32, #tpu.memory_space<vmem>>, vector<8x512xf32>
    tpu.vector_store %arg4[%c0_15, %c0_16], %49 {strides = array<i32>} : memref<8x512xf32, #tpu.memory_space<vmem>>, vector<8x512xf32>,
    return
  }
  func.func @transform_0(%arg0: i32, %arg1: i32) -> (i32, i32) {
    %c1_i32 = arith.constant 1 : i32
    %0 = arith.muli %arg0, %c1_i32 : i32
    %1 = arith.addi %0, %arg1 : i32
    %c0_i32 = arith.constant 0 : i32
    %c0_i32_0 = arith.constant 0 : i32
    return %1, %c0_i32 : i32, i32
  }
  func.func @transform_1(%arg0: i32, %arg1: i32) -> (i32, i32) {
    %c1_i32 = arith.constant 1 : i32
    %0 = arith.muli %arg0, %c1_i32 : i32
    %1 = arith.addi %0, %arg1 : i32
    %c0_i32 = arith.constant 0 : i32
    %c0_i32_0 = arith.constant 0 : i32
    return %1, %c0_i32 : i32, i32
  }
  func.func @transform_2(%arg0: i32, %arg1: i32) -> (i32, i32) {
    %c0_i32 = arith.constant 0 : i32
    %c0_i32_0 = arith.constant 0 : i32
    return %arg0, %c0_i32 : i32, i32
  }
}

</mosaic_0001>

<llo_original>
// kernel: tpu_custom_call.1
$region0: #{tpu_custom_call.1}
  #allocation0 [shape = 'u32[]', space=smem, size = 0x4, offset = 0x4, fixed_abs, tag = 'smem constant byte address 0x4 - core index']
  #allocation1 [shape = 'u32[72,128]{1,0:T(1,128)}', space=vmem, size = 0x9000, scoped, tag = 'internal scratch']
  %s0 = inlined_call_operand.hbm [shape: f32[8,512], index: 0, kind: input, shape index: {}]
  %s1 = inlined_call_operand.hbm [shape: f32[8,512], index: 1, kind: input, shape index: {}]
  %s2 = inlined_call_operand.hbm [shape: f32[8,512], index: 2, kind: output, shape index: {}]
  %s3 = sld [smem:[#allocation0]]
  $region30: #{tpu_custom_call.1} parent=0
    _
  %s5 = ssub.s32 1, %s3
  %s6 = scalar_select 0, %s5, %s3
  $region1: #{tpu_custom_call.1} parent=0
    #allocation2 [shape = 'u8[16384]{0}', space=vmem, size = 0x4000, scoped, tag = 'input window, operand 0, single buffered']
    #allocation3 [shape = 's32[1]{0}', space=sflag, size = 0x4, scoped, tag = 'scoped memory for tpu_custom_call.1']
    #allocation4 [shape = 's32[1]{0}', space=sflag, size = 0x4, scoped, tag = 'scoped memory for tpu_custom_call.1']
    #allocation5 [shape = 'u8[16384]{0}', space=vmem, size = 0x4000, scoped, tag = 'input window, operand 1, single buffered']
    #allocation6 [shape = 's32[1]{0}', space=sflag, size = 0x4, scoped, tag = 'scoped memory for tpu_custom_call.1']
    #allocation7 [shape = 'u8[16384]{0}', space=vmem, size = 0x4000, scoped, tag = 'output window, operand 0, single buffered']
    %7 = vsyncpa [#allocation3], 0
    %8 = vsyncpa [#allocation6], 0
    %9 = vsyncpa [#allocation4], 0
    // Predicated region
    $region2: #{tpu_custom_call.1} parent=1 // pred_check
      _
    $region3: #{tpu_custom_call.1} parent=1 // pred_check_branch
      %11 = sbr.rel (0) target = $region5
    $region4: #{tpu_custom_call.1} parent=1 // pred_region
      %s12 = sadd.s32 0, 0
      %14 = vsyncadd [#allocation3], 0
      %s15 = smul.addr %s12, 4
      %s16 = smul.addr %s15, 8
      %s17 = scalar_lea.hbm %s0, %s16
      %s19 = sshll.u32 %s17, 4
      %s20 = int_to_ptr.hbm [resolvable:$true] %s19
      %s21 = sshll.u32 [#allocation2], 4
      %s22 = int_to_ptr.vmem [resolvable:$true] %s21
      %24 = dma.hbm_to_vmem [thread:$0]  %s20, 512, %s22, [#allocation3]
    $region5: #{tpu_custom_call.1} parent=1 // pred_fallthru
      _
    // Predicated region
    $region6: #{tpu_custom_call.1} parent=1 // pred_check
      _
    $region7: #{tpu_custom_call.1} parent=1 // pred_check_branch
      %26 = sbr.rel (0) target = $region9
    $region8: #{tpu_custom_call.1} parent=1 // pred_region
      %s27 = sadd.s32 0, 0
      %29 = vsyncadd [#allocation6], 0
      %s30 = smul.addr %s27, 4
      %s31 = smul.addr %s30, 8
      %s32 = scalar_lea.hbm %s1, %s31
      %s34 = sshll.u32 %s32, 4
      %s35 = int_to_ptr.hbm [resolvable:$true] %s34
      %s36 = sshll.u32 [#allocation5], 4
      %s37 = int_to_ptr.vmem [resolvable:$true] %s36
      %39 = dma.hbm_to_vmem [thread:$0]  %s35, 512, %s37, [#allocation6]
    $region9: #{tpu_custom_call.1} parent=1 // pred_fallthru
      _
    // Predicated region
    $region10: #{tpu_custom_call.1} parent=1 // pred_check
      _
    $region11: #{tpu_custom_call.1} parent=1 // pred_check_branch
      %41 = sbr.rel (0) target = $region13
    $region12: #{tpu_custom_call.1} parent=1 // pred_region
      %43 = dma.done [#allocation3], 512
    $region13: #{tpu_custom_call.1} parent=1 // pred_fallthru
      _
    // Predicated region
    $region14: #{tpu_custom_call.1} parent=1 // pred_check
      _
    $region15: #{tpu_custom_call.1} parent=1 // pred_check_branch
      %45 = sbr.rel (0) target = $region17
    $region16: #{tpu_custom_call.1} parent=1 // pred_region
      %47 = dma.done [#allocation6], 512
    $region17: #{tpu_custom_call.1} parent=1 // pred_fallthru
      _
    %s48 = sadd.s32 0, 0
    %s49 = sadd.s32 0, 0
    %p50 = scmp.eq.s32.totalorder 0, 0
    // Predicated region
    $region18: #{tpu_custom_call.1} parent=1 // pred_check
      %p51 = pneg %p50
    $region19: #{tpu_custom_call.1} parent=1 // pred_check_branch
      %53 = sbr.rel (%p51) target = $region21
    $region20: #{tpu_custom_call.1} parent=1 // pred_region
      %54 = vst [vmem:[#allocation7] sm:$0xff] 0.0
      %55 = vst [vmem:[#allocation7 + $0x8] sm:$0xff] 0.0
      %56 = vst [vmem:[#allocation7 + $0x10] sm:$0xff] 0.0
      %57 = vst [vmem:[#allocation7 + $0x18] sm:$0xff] 0.0
    $region21: #{tpu_custom_call.1} parent=1 // pred_fallthru
      _
    %s58 = smul.u32 0, 4
    %s59 = smul.addr %s58, 8
    %s60 = scalar_lea.vmem [#allocation2], %s59
    %v61 = vld [vmem:[%s60] sm:$0xff]
    %v62 = vld [vmem:[%s60 + $0x8] sm:$0xff]
    %v63 = vld [vmem:[%s60 + $0x10] sm:$0xff]
    %v64 = vld [vmem:[%s60 + $0x18] sm:$0xff]
    %s65 = smul.addr %s58, 8
    %s66 = scalar_lea.vmem [#allocation5], %s65
    %v67 = vld [vmem:[%s66] sm:$0xff]
    %v68 = vld [vmem:[%s66 + $0x8] sm:$0xff]
    %v69 = vld [vmem:[%s66 + $0x10] sm:$0xff]
    %v70 = vld [vmem:[%s66 + $0x18] sm:$0xff]
    %v71 = vand.u32 2147483647, %v61
    %v72 = vand.u32 2147483647, %v62
    %v73 = vand.u32 2147483647, %v63
    %v74 = vand.u32 2147483647, %v64
    %v75 = vsub.f32 0.0, %v71
    %v76 = vsub.f32 0.0, %v72
    %v77 = vsub.f32 0.0, %v73
    %v78 = vsub.f32 0.0, %v74
    %v79 = vmul.f32 %v75, 1.442695
    %v80 = vpow.pop %v79
    %v81 = vmul.f32 %v76, 1.442695
    %v82 = vpow.pop %v81
    %v83 = vmul.f32 %v77, 1.442695
    %v84 = vpow.pop %v83
    %v85 = vmul.f32 %v78, 1.442695
    %v86 = vpow.pop %v85
    %v87 = vmax.f32 %v61, 0.0
    %v88 = vmax.f32 %v62, 0.0
    %v89 = vmax.f32 %v63, 0.0
    %v90 = vmax.f32 %v64, 0.0
    %v91 = vmul.f32 %v61, %v67
    %v92 = vmul.f32 %v62, %v68
    %v93 = vmul.f32 %v63, %v69
    %v94 = vmul.f32 %v64, %v70
    %v95 = vsub.f32 %v87, %v91
    %v96 = vsub.f32 %v88, %v92
    %v97 = vsub.f32 %v89, %v93
    %v98 = vsub.f32 %v90, %v94
    %v99 = vadd.f32 %v80, 1.0
    %v100 = vlog2.pop %v99
    %v101 = vmul.f32 %v100, 0.6931472
    %v102 = vmul.f32 -0.5, %v80
    %v103 = vadd.f32 %v102, 1.0
    %v104 = vmul.f32 %v103, %v80
    %v105 = vand.u32 2147483647, %v80
    %vm106 = vcmp.lt.f32.partialorder %v105, 0.0004427343
    %v107 = vsel %vm106, %v104, %v101
    %v108 = vadd.f32 %v82, 1.0
    %v109 = vlog2.pop %v108
    %v110 = vmul.f32 %v109, 0.6931472
    %v111 = vmul.f32 -0.5, %v82
    %v112 = vadd.f32 %v111, 1.0
    %v113 = vmul.f32 %v112, %v82
    %v114 = vand.u32 2147483647, %v82
    %vm115 = vcmp.lt.f32.partialorder %v114, 0.0004427343
    %v116 = vsel %vm115, %v113, %v110
    %v117 = vadd.f32 %v84, 1.0
    %v118 = vlog2.pop %v117
    %v119 = vmul.f32 %v118, 0.6931472
    %v120 = vmul.f32 -0.5, %v84
    %v121 = vadd.f32 %v120, 1.0
    %v122 = vmul.f32 %v121, %v84
    %v123 = vand.u32 2147483647, %v84
    %vm124 = vcmp.lt.f32.partialorder %v123, 0.0004427343
    %v125 = vsel %vm124, %v122, %v119
    %v126 = vadd.f32 %v86, 1.0
    %v127 = vlog2.pop %v126
    %v128 = vmul.f32 %v127, 0.6931472
    %v129 = vmul.f32 -0.5, %v86
    %v130 = vadd.f32 %v129, 1.0
    %v131 = vmul.f32 %v130, %v86
    %v132 = vand.u32 2147483647, %v86
    %vm133 = vcmp.lt.f32.partialorder %v132, 0.0004427343
    %v134 = vsel %vm133, %v131, %v128
    %v135 = vadd.f32 %v95, %v107
    %v136 = vadd.f32 %v96, %v116
    %v137 = vadd.f32 %v97, %v125
    %v138 = vadd.f32 %v98, %v134
    %v139 = vadd.f32 %v80, 1.0
    %v140 = vadd.f32 %v82, 1.0
    %v141 = vadd.f32 %v84, 1.0
    %v142 = vadd.f32 %v86, 1.0
    %v143 = vrcp.pop %v139
    %v144 = vrcp.pop %v140
    %v145 = vrcp.pop %v141
    %v146 = vrcp.pop %v142
    %vm147 = vcmp.ge.f32.partialorder %v61, 0.0
    %vm148 = vcmp.ge.f32.partialorder %v62, 0.0
    %vm149 = vcmp.ge.f32.partialorder %v63, 0.0
    %vm150 = vcmp.ge.f32.partialorder %v64, 0.0
    %v151 = vmul.f32 %v80, %v143
    %v152 = vmul.f32 %v82, %v144
    %v153 = vmul.f32 %v84, %v145
    %v154 = vmul.f32 %v86, %v146
    %v155 = vsel %vm147, %v143, %v151
    %v156 = vsel %vm148, %v144, %v152
    %v157 = vsel %vm149, %v145, %v153
    %v158 = vsel %vm150, %v146, %v154
    %v159 = vmul.f32 %v67, 0.25
    %v160 = vmul.f32 %v68, 0.25
    %v161 = vmul.f32 %v69, 0.25
    %v162 = vmul.f32 %v70, 0.25
    %v163 = vsub.f32 1.0, %v67
    %v164 = vsub.f32 1.0, %v68
    %v165 = vsub.f32 1.0, %v69
    %v166 = vsub.f32 1.0, %v70
    %v167 = vmul.f32 %v163, 0.75
    %v168 = vmul.f32 %v164, 0.75
    %v169 = vmul.f32 %v165, 0.75
    %v170 = vmul.f32 %v166, 0.75
    %v171 = vadd.f32 %v159, %v167
    %v172 = vadd.f32 %v160, %v168
    %v173 = vadd.f32 %v161, %v169
    %v174 = vadd.f32 %v162, %v170
    %v175 = vsub.f32 %v67, %v155
    %v176 = vsub.f32 %v68, %v156
    %v177 = vsub.f32 %v69, %v157
    %v178 = vsub.f32 %v70, %v158
    %v179 = vand.u32 2147483647, %v175
    %v180 = vand.u32 2147483647, %v176
    %v181 = vand.u32 2147483647, %v177
    %v182 = vand.u32 2147483647, %v178
    %vm183 = vcmp.gt.f32.partialorder %v179, 0.0
    %vm184 = vcmp.gt.f32.partialorder %v180, 0.0
    %vm185 = vcmp.gt.f32.partialorder %v181, 0.0
    %vm186 = vcmp.gt.f32.partialorder %v182, 0.0
    %v187 = vmul.f32 %v179, %v179
    %v188 = vmul.f32 %v180, %v180
    %v189 = vmul.f32 %v181, %v181
    %v190 = vmul.f32 %v182, %v182
    %v191 = vrsqrt.pop %v179
    %v192 = vmul.f32 %v191, %v179
    %v193 = vmul.f32 %v192, %v191
    %v194 = vmul.f32 0.5, %v193
    %v195 = vsub.f32 1.5, %v194
    %v196 = vmul.f32 %v191, %v195
    %vm197 = vweird.f32 %v179
    %vm198 = vweird.f32 %v191
    %vm199 = vmor %vm197, %vm198
    %v200 = vsel %vm199, %v191, %v196
    %v201 = vrsqrt.pop %v180
    %v202 = vmul.f32 %v201, %v180
    %v203 = vmul.f32 %v202, %v201
    %v204 = vmul.f32 0.5, %v203
    %v205 = vsub.f32 1.5, %v204
    %v206 = vmul.f32 %v201, %v205
    %vm207 = vweird.f32 %v180
    %vm208 = vweird.f32 %v201
    %vm209 = vmor %vm207, %vm208
    %v210 = vsel %vm209, %v201, %v206
    %v211 = vrsqrt.pop %v181
    %v212 = vmul.f32 %v211, %v181
    %v213 = vmul.f32 %v212, %v211
    %v214 = vmul.f32 0.5, %v213
    %v215 = vsub.f32 1.5, %v214
    %v216 = vmul.f32 %v211, %v215
    %vm217 = vweird.f32 %v181
    %vm218 = vweird.f32 %v211
    %vm219 = vmor %vm217, %vm218
    %v220 = vsel %vm219, %v211, %v216
    %v221 = vrsqrt.pop %v182
    %v222 = vmul.f32 %v221, %v182
    %v223 = vmul.f32 %v222, %v221
    %v224 = vmul.f32 0.5, %v223
    %v225 = vsub.f32 1.5, %v224
    %v226 = vmul.f32 %v221, %v225
    %vm227 = vweird.f32 %v182
    %vm228 = vweird.f32 %v221
    %vm229 = vmor %vm227, %vm228
    %v230 = vsel %vm229, %v221, %v226
    %v231 = vmul.f32 %v187, %v200
    %v232 = vmul.f32 %v188, %v210
    %v233 = vmul.f32 %v189, %v220
    %v234 = vmul.f32 %v190, %v230
    %v235 = vsel %vm183, %v231, 0.0
    %v236 = vsel %vm184, %v232, 0.0
    %v237 = vsel %vm185, %v233, 0.0
    %v238 = vsel %vm186, %v234, 0.0
    %v239 = vmul.f32 %v135, %v171
    %v240 = vmul.f32 %v136, %v172
    %v241 = vmul.f32 %v137, %v173
    %v242 = vmul.f32 %v138, %v174
    %v243 = vmul.f32 %v239, %v235
    %v244 = vmul.f32 %v240, %v236
    %v245 = vmul.f32 %v241, %v237
    %v246 = vmul.f32 %v242, %v238
    %v247 = vadd.f32 %v243, 0.0
    %v248 = vadd.f32 %v244, 0.0
    %v249 = vadd.f32 %v245, 0.0
    %v250 = vadd.f32 %v246, 0.0
    %v251 = vadd.f32 %v247, 0.0
    %v252 = vadd.f32 %v248, 0.0
    %v253 = vadd.f32 %v249, 0.0
    %v254 = vadd.f32 %v250, 0.0
    %v255 = vld [vmem:[#allocation7] sm:$0xff]
    %v256 = vld [vmem:[#allocation7 + $0x8] sm:$0xff]
    %v257 = vld [vmem:[#allocation7 + $0x10] sm:$0xff]
    %v258 = vld [vmem:[#allocation7 + $0x18] sm:$0xff]
    %v259 = vadd.f32 %v255, %v251
    %v260 = vadd.f32 %v256, %v252
    %v261 = vadd.f32 %v257, %v253
    %v262 = vadd.f32 %v258, %v254
    %263 = vst [vmem:[#allocation7] sm:$0xff] %v259
    %264 = vst [vmem:[#allocation7 + $0x8] sm:$0xff] %v260
    %265 = vst [vmem:[#allocation7 + $0x10] sm:$0xff] %v261
    %266 = vst [vmem:[#allocation7 + $0x18] sm:$0xff] %v262
    // Predicated region
    $region22: #{tpu_custom_call.1} parent=1 // pred_check
      _
    $region23: #{tpu_custom_call.1} parent=1 // pred_check_branch
      %268 = sbr.rel (0) target = $region25
    $region24: #{tpu_custom_call.1} parent=1 // pred_region
      %270 = vsyncadd [#allocation4], 0
      %s272 = sshll.u32 [#allocation7], 4
      %s273 = int_to_ptr.vmem [resolvable:$true] %s272
      %s274 = sshll.u32 %s2, 4
      %s275 = int_to_ptr.hbm [resolvable:$true] %s274
      %277 = dma.vmem_to_hbm [thread:$0]  %s273, 512, %s275, [#allocation4]
    $region25: #{tpu_custom_call.1} parent=1 // pred_fallthru
      _
    // Predicated region
    $region26: #{tpu_custom_call.1} parent=1 // pred_check
      _
    $region27: #{tpu_custom_call.1} parent=1 // pred_check_branch
      %279 = sbr.rel (0) target = $region29
    $region28: #{tpu_custom_call.1} parent=1 // pred_region
      %281 = dma.done [#allocation4], 512
    $region29: #{tpu_custom_call.1} parent=1 // pred_fallthru
      _
    %282 = vsyncpa [#allocation3], 1
    %283 = vsyncpa [#allocation6], 1
    %284 = vsyncpa [#allocation4], 1

</llo_original>
